<compile_context>
chip_gen: v6e
topology: v6e:2x2x1
jax: 0.10.0
libtpu: 0.0.40
codegen_flags: <defaults>
</compile_context>

<pallas_src>
import jax
import jax.numpy as jnp
from jax.experimental import pallas as pl
from jax.experimental.pallas import tpu as pltpu


def ffw_kernel(x_ref, w1_ref, b1_ref, w2_ref, b2_ref, o_ref):
    """One (TM, C) row tile of fused Linear(C->4C) + ReLU + Linear(4C->C).

    Weights/biases are VMEM-resident across the grid; x/out tiles stream.
    Both matmuls accumulate in f32 on the MXU; bias-add and ReLU happen in the
    f32 accumulator so the bf16 MXU-input path keeps elementwise math in f32.
    """
    h = jnp.dot(x_ref[...], w1_ref[...], preferred_element_type=jnp.float32)
    h = jnp.maximum(h + b1_ref[...], 0.0)                  # (TM, 4C), f32
    h = h.astype(w2_ref.dtype)                             # MXU input dtype
    out = jnp.dot(h, w2_ref[...], preferred_element_type=jnp.float32)
    o_ref[...] = (out + b2_ref[...]).astype(o_ref.dtype)   # (TM, C)


def feed_forward(x, w1, b1, w2, b2, *, tile_m=256, mxu_dtype=None):
    """x: (B, T, C); w1: (C, 4C); b1: (4C,); w2: (4C, C); b2: (C,)."""
    B, T, C = x.shape
    H = w1.shape[1]
    M = B * T

    if mxu_dtype is None:
        mxu_dtype = x.dtype
    out_dtype = x.dtype

    # Flatten batch & sequence into one fat M dim (one big matmul, not a
    # per-batch loop).  Cast MXU inputs; biases stay f32 (added pre-downcast).
    x2 = x.reshape(M, C).astype(mxu_dtype)
    w1c = w1.astype(mxu_dtype)
    w2c = w2.astype(mxu_dtype)
    b1r = b1.reshape(1, H).astype(jnp.float32)
    b2r = b2.reshape(1, C).astype(jnp.float32)

    # Row tile: multiple of 8 sublanes; >=256 fills the v6e/v7x MXU at
    # production M.  Pad M up to a tile multiple and slice the result back.
    tile_m = max(8, min(tile_m, M))
    m_pad = pl.cdiv(M, tile_m) * tile_m
    if m_pad != M:
        x2 = jnp.pad(x2, ((0, m_pad - M), (0, 0)))
    grid = (m_pad // tile_m,)

    in_itemsize = jnp.dtype(mxu_dtype).itemsize
    cost = pl.CostEstimate(
        flops=2 * M * C * H + 2 * M * H * C,               # two matmuls
        transcendentals=0,
        bytes_accessed=(x2.size * in_itemsize
                        + w1c.size * in_itemsize + w2c.size * in_itemsize
                        + (H + C) * 4
                        + M * C * jnp.dtype(out_dtype).itemsize),
    )

    out2 = pl.pallas_call(
        ffw_kernel,
        out_shape=jax.ShapeDtypeStruct((m_pad, C), out_dtype),
        grid=grid,
        in_specs=[
            pl.BlockSpec((tile_m, C), lambda i: (i, 0)),   # x: streamed tiles
            pl.BlockSpec((C, H), lambda i: (0, 0)),        # w1: resident
            pl.BlockSpec((1, H), lambda i: (0, 0)),        # b1: resident
            pl.BlockSpec((H, C), lambda i: (0, 0)),        # w2: resident
            pl.BlockSpec((1, C), lambda i: (0, 0)),        # b2: resident
        ],
        out_specs=pl.BlockSpec((tile_m, C), lambda i: (i, 0)),
        compiler_params=pltpu.CompilerParams(
            dimension_semantics=("parallel",),             # v7x: both TCs
            vmem_limit_bytes=64 * 1024 * 1024,
        ),
        cost_estimate=cost,
    )(x2, w1c, b1r, w2c, b2r)

    return out2[:M].reshape(B, T, C)


def feed_forward_ref(x, w1, b1, w2, b2):
    """Pure-JAX reference mirroring the PyTorch forward."""
    h = jnp.maximum(x @ w1 + b1, 0.0)
    return h @ w2 + b2


if __name__ == "__main__":
    num_embed = 32           # C
    hidden = 4 * num_embed   # 128
    B, T = 2, 8              # batch, block_size

    key = jax.random.PRNGKey(0)
    kx, kw1, kb1, kw2, kb2 = jax.random.split(key, 5)

    x = jax.random.normal(kx, (B, T, num_embed), dtype=jnp.float32)
    # nn.Linear(C, 4C) stores weight as (4C, C); we hold the transpose (C, 4C)
    # so the kernel computes x @ W — identical math to the PyTorch module.
    w1 = jax.random.normal(kw1, (num_embed, hidden), jnp.float32) * (num_embed ** -0.5)
    b1 = jax.random.normal(kb1, (hidden,), jnp.float32) * 0.1
    w2 = jax.random.normal(kw2, (hidden, num_embed), jnp.float32) * (hidden ** -0.5)
    b2 = jax.random.normal(kb2, (num_embed,), jnp.float32) * 0.1

    ref = feed_forward_ref(x, w1, b1, w2, b2)

    # f32 path (matches the PyTorch module's default dtype): strict check.
    # tile_m=8 -> a 2-step grid at toy shapes, exercising the streaming path.
    out = jax.block_until_ready(feed_forward(x, w1, b1, w2, b2, tile_m=8))
    assert out.shape == (B, T, num_embed)
    assert jnp.allclose(out, ref, atol=1e-5, rtol=1e-5), "f32 mismatch vs reference"

    # bf16 MXU-input path (production setting on v6e/v7x): loose check.
    out_bf16 = jax.block_until_ready(
        feed_forward(x, w1, b1, w2, b2, tile_m=8, mxu_dtype=jnp.bfloat16))
    assert jnp.allclose(out_bf16, ref, atol=5e-2, rtol=5e-2), "bf16 mismatch vs reference"

    print("KERNEL_OK")
</pallas_src>

<mosaic_0001>
module attributes {stable_mosaic.version = 11 : i64} {
  func.func @ffw_kernel(%arg0: i32, %arg1: memref<8x32xf32, #tpu.memory_space<vmem>>, %arg2: memref<32x128xf32, #tpu.memory_space<vmem>>, %arg3: memref<1x128xf32, #tpu.memory_space<vmem>>, %arg4: memref<128x32xf32, #tpu.memory_space<vmem>>, %arg5: memref<1x32xf32, #tpu.memory_space<vmem>>, %arg6: memref<8x32xf32, #tpu.memory_space<vmem>>) attributes {dimension_semantics = [#tpu.dimension_semantics<parallel>], iteration_bounds = array<i64: 2>, scalar_prefetch = 0 : i64, scratch_operands = 0 : i64, tpu.core_type = #tpu.core_type<tc>, window_params = [{transform_indices = @transform_0, window_bounds = array<i64: 8, 32>}, {pipeline_mode = #tpu.pipeline_mode<synchronous>, transform_indices = @transform_1, window_bounds = array<i64: 32, 128>}, {pipeline_mode = #tpu.pipeline_mode<synchronous>, transform_indices = @transform_2, window_bounds = array<i64: 1, 128>}, {pipeline_mode = #tpu.pipeline_mode<synchronous>, transform_indices = @transform_3, window_bounds = array<i64: 128, 32>}, {pipeline_mode = #tpu.pipeline_mode<synchronous>, transform_indices = @transform_4, window_bounds = array<i64: 1, 32>}, {transform_indices = @transform_5, window_bounds = array<i64: 8, 32>}]} {
    %c0 = arith.constant 0 : index
    %c0_0 = arith.constant 0 : index
    %0 = vector.load %arg1[%c0, %c0_0] : memref<8x32xf32, #tpu.memory_space<vmem>>, vector<8x32xf32>
    %c0_1 = arith.constant 0 : index
    %c0_2 = arith.constant 0 : index
    %1 = vector.load %arg2[%c0_1, %c0_2] : memref<32x128xf32, #tpu.memory_space<vmem>>, vector<32x128xf32>
    %cst = arith.constant dense<0.000000e+00> : vector<8x128xf32>
    %2 = tpu.matmul %0, %1, %cst {dimension_numbers = #tpu.dot_dimension_numbers<[1], [0], [0], [1], [0, 0, 1, 1], [], []>} : vector<8x32xf32>, vector<32x128xf32>, vector<8x128xf32> -> vector<8x128xf32>
    %c0_3 = arith.constant 0 : index
    %c0_4 = arith.constant 0 : index
    %3 = vector.load %arg3[%c0_3, %c0_4] : memref<1x128xf32, #tpu.memory_space<vmem>>, vector<1x128xf32>
    %4 = vector.broadcast %3 : vector<1x128xf32> to vector<8x128xf32>
    %5 = arith.addf %2, %4 : vector<8x128xf32>
    %cst_5 = arith.constant 0.000000e+00 : f32
    %6 = vector.broadcast %cst_5 : f32 to vector<8x128xf32>
    %7 = arith.maximumf %5, %6 : vector<8x128xf32>
    %c0_6 = arith.constant 0 : index
    %c0_7 = arith.constant 0 : index
    %8 = vector.load %arg4[%c0_6, %c0_7] : memref<128x32xf32, #tpu.memory_space<vmem>>, vector<128x32xf32>
    %cst_8 = arith.constant dense<0.000000e+00> : vector<8x32xf32>
    %9 = tpu.matmul %7, %8, %cst_8 {dimension_numbers = #tpu.dot_dimension_numbers<[1], [0], [0], [1], [0, 0, 1, 1], [], []>} : vector<8x128xf32>, vector<128x32xf32>, vector<8x32xf32> -> vector<8x32xf32>
    %c0_9 = arith.constant 0 : index
    %c0_10 = arith.constant 0 : index
    %10 = vector.load %arg5[%c0_9, %c0_10] : memref<1x32xf32, #tpu.memory_space<vmem>>, vector<1x32xf32>
    %11 = vector.broadcast %10 : vector<1x32xf32> to vector<8x32xf32>
    %12 = arith.addf %9, %11 : vector<8x32xf32>
    %c0_11 = arith.constant 0 : index
    %c0_12 = arith.constant 0 : index
    %13 = vector.load %arg6[%c0_11, %c0_12] : memref<8x32xf32, #tpu.memory_space<vmem>>, vector<8x32xf32>
    tpu.vector_store %arg6[%c0_11, %c0_12], %12 {strides = array<i32>} : memref<8x32xf32, #tpu.memory_space<vmem>>, vector<8x32xf32>,
    return
  }
  func.func @transform_0(%arg0: i32) -> (i32, i32) {
    %c0_i32 = arith.constant 0 : i32
    %c0_i32_0 = arith.constant 0 : i32
    return %arg0, %c0_i32 : i32, i32
  }
  func.func @transform_1(%arg0: i32) -> (i32, i32) {
    %c0_i32 = arith.constant 0 : i32
    %c0_i32_0 = arith.constant 0 : i32
    %c0_i32_1 = arith.constant 0 : i32
    return %c0_i32, %c0_i32_0 : i32, i32
  }
  func.func @transform_2(%arg0: i32) -> (i32, i32) {
    %c0_i32 = arith.constant 0 : i32
    %c0_i32_0 = arith.constant 0 : i32
    %c0_i32_1 = arith.constant 0 : i32
    return %c0_i32, %c0_i32_0 : i32, i32
  }
  func.func @transform_3(%arg0: i32) -> (i32, i32) {
    %c0_i32 = arith.constant 0 : i32
    %c0_i32_0 = arith.constant 0 : i32
    %c0_i32_1 = arith.constant 0 : i32
    return %c0_i32, %c0_i32_0 : i32, i32
  }
  func.func @transform_4(%arg0: i32) -> (i32, i32) {
    %c0_i32 = arith.constant 0 : i32
    %c0_i32_0 = arith.constant 0 : i32
    %c0_i32_1 = arith.constant 0 : i32
    return %c0_i32, %c0_i32_0 : i32, i32
  }
  func.func @transform_5(%arg0: i32) -> (i32, i32) {
    %c0_i32 = arith.constant 0 : i32
    %c0_i32_0 = arith.constant 0 : i32
    return %arg0, %c0_i32 : i32, i32
  }
}

</mosaic_0001>

<llo_original>
// kernel: tpu_custom_call.1
$region0: #{tpu_custom_call.1}
  #allocation0 [shape = 'u32[]', space=smem, size = 0x4, offset = 0x4, fixed_abs, tag = 'smem constant byte address 0x4 - core index']
  #allocation1 [shape = 'u32[144,128]{1,0:T(1,128)}', space=vmem, size = 0x12000, scoped, tag = 'internal scratch']
  %s0 = inlined_call_operand.vmem [shape: f32[16,32], index: 0, kind: input, shape index: {}]
  %s1 = inlined_call_operand.vmem [shape: f32[32,128], index: 1, kind: input, shape index: {}]
  %s2 = inlined_call_operand.vmem [shape: f32[1,128], index: 2, kind: input, shape index: {}]
  %s3 = inlined_call_operand.vmem [shape: f32[128,32], index: 3, kind: input, shape index: {}]
  %s4 = inlined_call_operand.vmem [shape: f32[1,32], index: 4, kind: input, shape index: {}]
  %s5 = inlined_call_operand.hbm [shape: f32[16,32], index: 5, kind: output, shape index: {}]
  %s6 = sld [smem:[#allocation0]]
  $region53: #{tpu_custom_call.1} parent=0
    _
  %s8 = ssub.s32 1, %s6
  %s9 = scalar_select 0, %s8, %s6
  $region1: #{tpu_custom_call.1} parent=0
    #allocation2 [shape = 'u8[8192]{0}', space=vmem, size = 0x2000, scoped, tag = 'output window, operand 0']
    #allocation3 [shape = 's32[2]{0}', space=sflag, size = 0x8, scoped, tag = 'scoped memory for tpu_custom_call.1']
    %10 = vsyncpa [#allocation3], 0
    %s11 = scalar_lea.sflag [#allocation3], 1
    %12 = vsyncpa %s11, 0
    loop: start=0, step=1, limit=4
    $region2: #{tpu_custom_call.1} parent=1 // loop_pre_header
      _
    $region3: #{tpu_custom_call.1} parent=1 // loop_header
      %s14 = sphi 0, %s18
      %p15 = scmp.ge.s32.totalorder %s14, 4
      %s24 = sphi 0, %s26
      %s27 = sphi 0, %s24
      %s28 = sphi 0, %s27
      %s44 = sphi 0, %s28
      %s48 = sphi 0, %s48
      %s50 = sphi 0, %s48
      %s51 = sphi 0, %s50
      %s65 = sphi 0, %s51
      %s69 = sphi 0, %s69
      %s71 = sphi 0, %s69
      %s72 = sphi 0, %s71
      %s86 = sphi 0, %s72
      %s90 = sphi 0, %s90
      %s92 = sphi 0, %s90
      %s93 = sphi 0, %s92
      %s107 = sphi 0, %s93
      %s111 = sphi 0, %s111
      %s113 = sphi 0, %s111
      %s114 = sphi 0, %s113
      %s128 = sphi 0, %s114
      %s134 = sphi 0, %s136
      %s137 = sphi 0, %s134
      %s138 = sphi 0, %s137
      %s154 = sphi 0, %s138
    $region4: #{tpu_custom_call.1} parent=1 // loop_header_branch
      %17 = sbr.rel (%p15) target = $region8
    $region5: #{tpu_custom_call.1} parent=1 // loop_body
      %s19 = ssub.s32 %s14, 1
      %s20 = ssub.s32 %s14, 2
      %s21 = sadd.s32 %s14, 1
      %s22 = ssub.s32 %s14, %s21
      %p23 = scmp.eq.s32.totalorder %s22, 0
      %s25 = sadd.s32 %s24, 1
      %s26 = scalar_select %p23, %s24, %s25
      %p29 = pneg %p23
      %p30 = scmp.eq.s32.totalorder %s14, 1
      %p31 = por %p29, %p30
      %p32 = scmp.ne.s32.totalorder %s24, %s27
      %p33 = scmp.eq.s32.totalorder %s14, 0
      %p34 = por %p32, %p33
      %p35 = scmp.ne.s32.totalorder %s24, %s27
      %p36 = scmp.eq.s32.totalorder %s19, 1
      %p37 = por %p35, %p36
      %p38 = scmp.ne.s32.totalorder %s27, %s28
      %p39 = scmp.eq.s32.totalorder %s19, 0
      %p40 = por %p38, %p39
      %p41 = scmp.ne.s32.totalorder %s27, %s28
      %p42 = scmp.eq.s32.totalorder %s20, 1
      %p43 = por %p41, %p42
      %p45 = scmp.ne.s32.totalorder %s28, %s44
      %p46 = scmp.eq.s32.totalorder %s20, 0
      %p47 = por %p45, %p46
      %s49 = sadd.s32 %s48, 1
      %p52 = scmp.eq.s32.totalorder %s14, 1
      %p53 = scmp.ne.s32.totalorder %s48, %s50
      %p54 = scmp.eq.s32.totalorder %s14, 0
      %p55 = por %p53, %p54
      %p56 = scmp.ne.s32.totalorder %s48, %s50
      %p57 = scmp.eq.s32.totalorder %s19, 1
      %p58 = por %p56, %p57
      %p59 = scmp.ne.s32.totalorder %s50, %s51
      %p60 = scmp.eq.s32.totalorder %s19, 0
      %p61 = por %p59, %p60
      %p62 = scmp.ne.s32.totalorder %s50, %s51
      %p63 = scmp.eq.s32.totalorder %s20, 1
      %p64 = por %p62, %p63
      %p66 = scmp.ne.s32.totalorder %s51, %s65
      %p67 = scmp.eq.s32.totalorder %s20, 0
      %p68 = por %p66, %p67
      %s70 = sadd.s32 %s69, 1
      %p73 = scmp.eq.s32.totalorder %s14, 1
      %p74 = scmp.ne.s32.totalorder %s69, %s71
      %p75 = scmp.eq.s32.totalorder %s14, 0
      %p76 = por %p74, %p75
      %p77 = scmp.ne.s32.totalorder %s69, %s71
      %p78 = scmp.eq.s32.totalorder %s19, 1
      %p79 = por %p77, %p78
      %p80 = scmp.ne.s32.totalorder %s71, %s72
      %p81 = scmp.eq.s32.totalorder %s19, 0
      %p82 = por %p80, %p81
      %p83 = scmp.ne.s32.totalorder %s71, %s72
      %p84 = scmp.eq.s32.totalorder %s20, 1
      %p85 = por %p83, %p84
      %p87 = scmp.ne.s32.totalorder %s72, %s86
      %p88 = scmp.eq.s32.totalorder %s20, 0
      %p89 = por %p87, %p88
      %s91 = sadd.s32 %s90, 1
      %p94 = scmp.eq.s32.totalorder %s14, 1
      %p95 = scmp.ne.s32.totalorder %s90, %s92
      %p96 = scmp.eq.s32.totalorder %s14, 0
      %p97 = por %p95, %p96
      %p98 = scmp.ne.s32.totalorder %s90, %s92
      %p99 = scmp.eq.s32.totalorder %s19, 1
      %p100 = por %p98, %p99
      %p101 = scmp.ne.s32.totalorder %s92, %s93
      %p102 = scmp.eq.s32.totalorder %s19, 0
      %p103 = por %p101, %p102
      %p104 = scmp.ne.s32.totalorder %s92, %s93
      %p105 = scmp.eq.s32.totalorder %s20, 1
      %p106 = por %p104, %p105
      %p108 = scmp.ne.s32.totalorder %s93, %s107
      %p109 = scmp.eq.s32.totalorder %s20, 0
      %p110 = por %p108, %p109
      %s112 = sadd.s32 %s111, 1
      %p115 = scmp.eq.s32.totalorder %s14, 1
      %p116 = scmp.ne.s32.totalorder %s111, %s113
      %p117 = scmp.eq.s32.totalorder %s14, 0
      %p118 = por %p116, %p117
      %p119 = scmp.ne.s32.totalorder %s111, %s113
      %p120 = scmp.eq.s32.totalorder %s19, 1
      %p121 = por %p119, %p120
      %p122 = scmp.ne.s32.totalorder %s113, %s114
      %p123 = scmp.eq.s32.totalorder %s19, 0
      %p124 = por %p122, %p123
      %p125 = scmp.ne.s32.totalorder %s113, %s114
      %p126 = scmp.eq.s32.totalorder %s20, 1
      %p127 = por %p125, %p126
      %p129 = scmp.ne.s32.totalorder %s114, %s128
      %p130 = scmp.eq.s32.totalorder %s20, 0
      %p131 = por %p129, %p130
      %s132 = ssub.s32 %s14, %s21
      %p133 = scmp.eq.s32.totalorder %s132, 0
      %s135 = sadd.s32 %s134, 1
      %s136 = scalar_select %p133, %s134, %s135
      %p139 = pneg %p133
      %p140 = scmp.eq.s32.totalorder %s14, 1
      %p141 = por %p139, %p140
      %p142 = scmp.ne.s32.totalorder %s134, %s137
      %p143 = scmp.eq.s32.totalorder %s14, 0
      %p144 = por %p142, %p143
      %p145 = scmp.ne.s32.totalorder %s134, %s137
      %p146 = scmp.eq.s32.totalorder %s19, 1
      %p147 = por %p145, %p146
      %p148 = scmp.ne.s32.totalorder %s137, %s138
      %p149 = scmp.eq.s32.totalorder %s19, 0
      %p150 = por %p148, %p149
      %p151 = scmp.ne.s32.totalorder %s137, %s138
      %p152 = scmp.eq.s32.totalorder %s20, 1
      %p153 = por %p151, %p152
      %p155 = scmp.ne.s32.totalorder %s138, %s154
      %p156 = scmp.eq.s32.totalorder %s20, 0
      %p157 = por %p155, %p156
      %p158 = scmp.le.s32.totalorder 1, %s14
      %p159 = scmp.lt.s32.totalorder %s14, 3
      %p160 = pnand %p158, %p159
      %p161 = pneg %p160
      // Predicated region
      $region9: #{tpu_custom_call.1} parent=5 // pred_check
        _
      $region10: #{tpu_custom_call.1} parent=5 // pred_check_branch
        %163 = sbr.rel (%p160) target = $region12
      $region11: #{tpu_custom_call.1} parent=5 // pred_region
        %s164 = ssub.s32 %s14, 1
        // Predicated region
        $region13: #{tpu_custom_call.1} parent=11 // pred_check
          %p165 = pneg %p61
        $region14: #{tpu_custom_call.1} parent=11 // pred_check_branch
          %167 = sbr.rel (%p165) target = $region16
        $region15: #{tpu_custom_call.1} parent=11 // pred_region
          _
        $region16: #{tpu_custom_call.1} parent=11 // pred_fallthru
          _
        // Predicated region
        $region17: #{tpu_custom_call.1} parent=11 // pred_check
          %p168 = pneg %p82
        $region18: #{tpu_custom_call.1} parent=11 // pred_check_branch
          %170 = sbr.rel (%p168) target = $region20
        $region19: #{tpu_custom_call.1} parent=11 // pred_region
          _
        $region20: #{tpu_custom_call.1} parent=11 // pred_fallthru
          _
        // Predicated region
        $region21: #{tpu_custom_call.1} parent=11 // pred_check
          %p171 = pneg %p103
        $region22: #{tpu_custom_call.1} parent=11 // pred_check_branch
          %173 = sbr.rel (%p171) target = $region24
        $region23: #{tpu_custom_call.1} parent=11 // pred_region
          _
        $region24: #{tpu_custom_call.1} parent=11 // pred_fallthru
          _
        // Predicated region
        $region25: #{tpu_custom_call.1} parent=11 // pred_check
          %p174 = pneg %p124
        $region26: #{tpu_custom_call.1} parent=11 // pred_check_branch
          %176 = sbr.rel (%p174) target = $region28
        $region27: #{tpu_custom_call.1} parent=11 // pred_region
          _
        $region28: #{tpu_custom_call.1} parent=11 // pred_fallthru
          _
      $region12: #{tpu_custom_call.1} parent=5 // pred_fallthru
        _
      %p177 = scmp.lt.s32.totalorder %s14, 2
      // Predicated region
      $region29: #{tpu_custom_call.1} parent=5 // pred_check
        %p178 = pneg %p177
      $region30: #{tpu_custom_call.1} parent=5 // pred_check_branch
        %180 = sbr.rel (%p178) target = $region32
      $region31: #{tpu_custom_call.1} parent=5 // pred_region
        // Predicated region
        $region33: #{tpu_custom_call.1} parent=31 // pred_check
          %p181 = pneg %p34
        $region34: #{tpu_custom_call.1} parent=31 // pred_check_branch
          %183 = sbr.rel (%p181) target = $region36
        $region35: #{tpu_custom_call.1} parent=31 // pred_region
          %p184 = scmp.lt.s32.totalorder %s14, 1
          %s185 = scalar_select %p184, %s14, 1
          %s186 = smul.addr %s185, 8
          %s187 = scalar_lea.vmem %s0, %s186
        $region36: #{tpu_custom_call.1} parent=31 // pred_fallthru
          _
      $region32: #{tpu_custom_call.1} parent=5 // pred_fallthru
        _
      %p188 = scmp.le.s32.totalorder 1, %s14
      %p189 = scmp.lt.s32.totalorder %s14, 3
      %p190 = pnand %p188, %p189
      %p191 = pneg %p190
      // Predicated region
      $region37: #{tpu_custom_call.1} parent=5 // pred_check
        _
      $region38: #{tpu_custom_call.1} parent=5 // pred_check_branch
        %193 = sbr.rel (%p190) target = $region40
      $region39: #{tpu_custom_call.1} parent=5 // pred_region
        %s194 = ssub.s32 %s14, 1
        %p195 = scmp.lt.s32.totalorder %s19, 1
        %s196 = scalar_select %p195, %s19, 1
        %s197 = smul.addr %s196, 8
        %s198 = scalar_lea.vmem %s0, %s197
        %p199 = pneg %p40
        %p200 = pneg %p37
        %p201 = pneg %p61
        %p202 = pneg %p58
        %p203 = pneg %p82
        %p204 = pneg %p79
        %p205 = pneg %p103
        %p206 = pneg %p100
        %p207 = pneg %p124
        %p208 = pneg %p121
        %p209 = pneg %p150
        %p210 = pneg %p147
        %s211 = sand.u32 %s137, 1
        %s212 = scalar_lea.sflag [#allocation3], %s211
        %s213 = sand.u32 %s137, 1
        %s214 = smul.addr %s213, 8
        %s215 = scalar_lea.vmem [#allocation2], %s214
        %p216 = scmp.lt.s32.totalorder %s19, 1
        %s217 = scalar_select %p216, %s19, 1
        %s218 = smul.addr %s217, 8
        %s219 = scalar_lea.vmem %s0, %s218
        %v220 = vld [vmem:[%s219] sm:$0xff]
        %v221 = vld [vmem:[%s1] sm:$0xff]
        %v222 = vld [vmem:[%s1 + $0x8] sm:$0xff]
        %v223 = vld [vmem:[%s1 + $0x10] sm:$0xff]
        %v224 = vld [vmem:[%s1 + $0x18] sm:$0xff]
        %v225 = vld [vmem:[%s2] sm:$0x1]
        %v227 = vlaneseq
        %v228 = vshrl.u32 %v227, 7
        %v229 = vsub.s32 0, %v228
        %v230 = vrot.slane %v225, %v229
        %vm232 = vcmask 261120
        %v234 = vsel %vm232, %v220, 0
        %236 = vmatprep.subr.mxu0 0.0
        %237 = vmatpush1.msra.mxu0 0.0
        %238 = vmatprep.subr.mxu0 0.0
        %239 = vmatpush1.msra.mxu0 0.0
        %240 = vmatprep.subr.mxu0 0.0
        %241 = vmatpush1.msra.mxu0 0.0
        %242 = vmatprep.subr.mxu0 0.0
        %243 = vmatpush1.msra.mxu0 0.0
        %244 = vmatprep.subr.mxu0 0.0
        %245 = vmatpush1.msra.mxu0 0.0
        %246 = vmatprep.subr.mxu0 0.0
        %247 = vmatpush1.msra.mxu0 0.0
        %248 = vmatprep.subr.mxu0 0.0
        %249 = vmatpush1.msra.mxu0 0.0
        %250 = vmatprep.subr.mxu0 0.0
        %251 = vmatpush1.msra.mxu0 0.0
        %252 = vmatprep.subr.mxu0 0.0
        %253 = vmatpush1.msra.mxu0 0.0
        %254 = vmatprep.subr.mxu0 0.0
        %255 = vmatpush1.msra.mxu0 0.0
        %256 = vmatprep.subr.mxu0 0.0
        %257 = vmatpush1.msra.mxu0 0.0
        %258 = vmatprep.subr.mxu0 0.0
        %259 = vmatpush1.msra.mxu0 0.0
        %260 = vmatprep.subr.mxu0 0.0
        %261 = vmatpush1.msra.mxu0 %v224
        %262 = vmatprep.subr.mxu0 0.0
        %263 = vmatpush1.msra.mxu0 %v223
        %264 = vmatprep.subr.mxu0 0.0
        %265 = vmatpush1.msra.mxu0 %v222
        %266 = vmatprep.subr.mxu0 0.0
        %267 = vmatpush1.msra.mxu0 %v221
        %268 = vmatprep.subr.mxu0 0.0
        %269 = vmatpush2.msra.mxu0 0.0
        %270 = vmatprep.subr.mxu0 0.0
        %271 = vmatpush2.msra.mxu0 0.0
        %272 = vmatprep.subr.mxu0 0.0
        %273 = vmatpush2.msra.mxu0 0.0
        %274 = vmatprep.subr.mxu0 0.0
        %275 = vmatpush2.msra.mxu0 0.0
        %276 = vmatprep.subr.mxu0 0.0
        %277 = vmatpush2.msra.mxu0 0.0
        %278 = vmatprep.subr.mxu0 0.0
        %279 = vmatpush2.msra.mxu0 0.0
        %280 = vmatprep.subr.mxu0 0.0
        %281 = vmatpush2.msra.mxu0 0.0
        %282 = vmatprep.subr.mxu0 0.0
        %283 = vmatpush2.msra.mxu0 0.0
        %284 = vmatprep.subr.mxu0 0.0
        %285 = vmatpush2.msra.mxu0 0.0
        %286 = vmatprep.subr.mxu0 0.0
        %287 = vmatpush2.msra.mxu0 0.0
        %288 = vmatprep.subr.mxu0 0.0
        %289 = vmatpush2.msra.mxu0 0.0
        %290 = vmatprep.subr.mxu0 0.0
        %291 = vmatpush2.msra.mxu0 0.0
        %292 = vmatprep.subr.mxu0 0.0
        %293 = vmatpush2.msra.mxu0 0.0
        %294 = vmatprep.subr.mxu0 0.0
        %295 = vmatpush2.msra.mxu0 0.0
        %296 = vmatprep.subr.mxu0 0.0
        %297 = vmatpush2.msra.mxu0 0.0
        %298 = vmatprep.subr.mxu0 0.0
        %299 = vmatpush2.msra.mxu0 0.0
        %300 = vmatprep.mubr.f32.mxu0 0.0
        %301 = vmatmul.mubr.f32.gmra.mxu0 %v234
        %v302 = vpop.f32.mrf.mxu0
        %v303 = vadd.f32 %v230, %v302
        %v304 = vpop.f32.mrf.mxu0
        %305 = vdwg.mxu0
        %v306 = vmax.f32 %v303, 0.0
        %v307 = vld [vmem:[%s3] sm:$0xff]
        %v308 = vld [vmem:[%s3 + $0x8] sm:$0xff]
        %v309 = vld [vmem:[%s3 + $0x10] sm:$0xff]
        %v310 = vld [vmem:[%s3 + $0x18] sm:$0xff]
        %v311 = vld [vmem:[%s3 + $0x20] sm:$0xff]
        %v312 = vld [vmem:[%s3 + $0x28] sm:$0xff]
        %v313 = vld [vmem:[%s3 + $0x30] sm:$0xff]
        %v314 = vld [vmem:[%s3 + $0x38] sm:$0xff]
        %v315 = vld [vmem:[%s3 + $0x40] sm:$0xff]
        %v316 = vld [vmem:[%s3 + $0x48] sm:$0xff]
        %v317 = vld [vmem:[%s3 + $0x50] sm:$0xff]
        %v318 = vld [vmem:[%s3 + $0x58] sm:$0xff]
        %v319 = vld [vmem:[%s3 + $0x60] sm:$0xff]
        %v320 = vld [vmem:[%s3 + $0x68] sm:$0xff]
        %v321 = vld [vmem:[%s3 + $0x70] sm:$0xff]
        %v322 = vld [vmem:[%s3 + $0x78] sm:$0xff]
        %v323 = vld [vmem:[%s4] sm:$0x1]
        %v325 = vlaneseq
        %v326 = vshrl.u32 %v325, 7
        %v327 = vsub.s32 0, %v326
        %v328 = vrot.slane %v323, %v327
        %330 = vmatprep.subr.mxu0 0.0
        %331 = vmatpush1.msra.mxu0 %v322
        %332 = vmatprep.subr.mxu0 0.0
        %333 = vmatpush1.msra.mxu0 %v321
        %334 = vmatprep.subr.mxu0 0.0
        %335 = vmatpush1.msra.mxu0 %v320
        %336 = vmatprep.subr.mxu0 0.0
        %337 = vmatpush1.msra.mxu0 %v319
        %338 = vmatprep.subr.mxu0 0.0
        %339 = vmatpush1.msra.mxu0 %v318
        %340 = vmatprep.subr.mxu0 0.0
        %341 = vmatpush1.msra.mxu0 %v317
        %342 = vmatprep.subr.mxu0 0.0
        %343 = vmatpush1.msra.mxu0 %v316
        %344 = vmatprep.subr.mxu0 0.0
        %345 = vmatpush1.msra.mxu0 %v315
        %346 = vmatprep.subr.mxu0 0.0
        %347 = vmatpush1.msra.mxu0 %v314
        %348 = vmatprep.subr.mxu0 0.0
        %349 = vmatpush1.msra.mxu0 %v313
        %350 = vmatprep.subr.mxu0 0.0
        %351 = vmatpush1.msra.mxu0 %v312
        %352 = vmatprep.subr.mxu0 0.0
        %353 = vmatpush1.msra.mxu0 %v311
        %354 = vmatprep.subr.mxu0 0.0
        %355 = vmatpush1.msra.mxu0 %v310
        %356 = vmatprep.subr.mxu0 0.0
        %357 = vmatpush1.msra.mxu0 %v309
        %358 = vmatprep.subr.mxu0 0.0
        %359 = vmatpush1.msra.mxu0 %v308
        %360 = vmatprep.subr.mxu0 0.0
        %361 = vmatpush1.msra.mxu0 %v307
        %362 = vmatprep.subr.mxu0 0.0
        %363 = vmatpush2.msra.mxu0 0.0
        %364 = vmatprep.subr.mxu0 0.0
        %365 = vmatpush2.msra.mxu0 0.0
        %366 = vmatprep.subr.mxu0 0.0
        %367 = vmatpush2.msra.mxu0 0.0
        %368 = vmatprep.subr.mxu0 0.0
        %369 = vmatpush2.msra.mxu0 0.0
        %370 = vmatprep.subr.mxu0 0.0
        %371 = vmatpush2.msra.mxu0 0.0
        %372 = vmatprep.subr.mxu0 0.0
        %373 = vmatpush2.msra.mxu0 0.0
        %374 = vmatprep.subr.mxu0 0.0
        %375 = vmatpush2.msra.mxu0 0.0
        %376 = vmatprep.subr.mxu0 0.0
        %377 = vmatpush2.msra.mxu0 0.0
        %378 = vmatprep.subr.mxu0 0.0
        %379 = vmatpush2.msra.mxu0 0.0
        %380 = vmatprep.subr.mxu0 0.0
        %381 = vmatpush2.msra.mxu0 0.0
        %382 = vmatprep.subr.mxu0 0.0
        %383 = vmatpush2.msra.mxu0 0.0
        %384 = vmatprep.subr.mxu0 0.0
        %385 = vmatpush2.msra.mxu0 0.0
        %386 = vmatprep.subr.mxu0 0.0
        %387 = vmatpush2.msra.mxu0 0.0
        %388 = vmatprep.subr.mxu0 0.0
        %389 = vmatpush2.msra.mxu0 0.0
        %390 = vmatprep.subr.mxu0 0.0
        %391 = vmatpush2.msra.mxu0 0.0
        %392 = vmatprep.subr.mxu0 0.0
        %393 = vmatpush2.msra.mxu0 0.0
        %394 = vmatprep.mubr.f32.mxu0 0.0
        %395 = vmatmul.mubr.f32.gmra.mxu0 %v306
        %v396 = vpop.f32.mrf.mxu0
        %v397 = vadd.f32 %v328, %v396
        %v398 = vpop.f32.mrf.mxu0
        %399 = vdwg.mxu0
        %400 = vst.msk [vmem:[%s215] sm:$0xff] %vm232, %v397
        %s401 = sand.u32 %s137, 1
        %s402 = scalar_lea.sflag [#allocation3], %s401
        %s403 = sand.u32 %s137, 1
        %s404 = smul.addr %s403, 8
        %s405 = scalar_lea.vmem [#allocation2], %s404
        // Predicated region
        $region41: #{tpu_custom_call.1} parent=39 // pred_check
          %p406 = pneg %p147
        $region42: #{tpu_custom_call.1} parent=39 // pred_check_branch
          %408 = sbr.rel (%p406) target = $region44
        $region43: #{tpu_custom_call.1} parent=39 // pred_region
          %s410 = ssub.s32 128, 128
          %411 = vsyncadd %s402, %s410
          %s412 = smul.addr %s19, 128
          %s413 = scalar_lea.hbm %s5, %s412
          %s415 = sshll.u32 %s405, 4
          %s416 = int_to_ptr.vmem [resolvable:$true] %s415
          %418 = dma.vmem_to_hbm [thread:$0]  %s416, 128, %s413, %s402
        $region44: #{tpu_custom_call.1} parent=39 // pred_fallthru
          _
      $region40: #{tpu_custom_call.1} parent=5 // pred_fallthru
        _
      %p419 = scmp.le.s32.totalorder 2, %s14
      // Predicated region
      $region45: #{tpu_custom_call.1} parent=5 // pred_check
        %p420 = pneg %p419
      $region46: #{tpu_custom_call.1} parent=5 // pred_check_branch
        %422 = sbr.rel (%p420) target = $region48
      $region47: #{tpu_custom_call.1} parent=5 // pred_region
        %s423 = ssub.s32 %s14, 2
        // Predicated region
        $region49: #{tpu_custom_call.1} parent=47 // pred_check
          %p424 = pneg %p153
        $region50: #{tpu_custom_call.1} parent=47 // pred_check_branch
          %426 = sbr.rel (%p424) target = $region52
        $region51: #{tpu_custom_call.1} parent=47 // pred_region
          %s427 = sand.u32 %s138, 1
          %s428 = scalar_lea.sflag [#allocation3], %s427
          %s429 = sand.u32 %s138, 1
          %s430 = smul.addr %s429, 8
          %s431 = scalar_lea.vmem [#allocation2], %s430
          %432 = dma.done %s428, 128
        $region52: #{tpu_custom_call.1} parent=47 // pred_fallthru
          _
      $region48: #{tpu_custom_call.1} parent=5 // pred_fallthru
        _
    $region6: #{tpu_custom_call.1} parent=1 // loop_footer
      %s18 = sadd.s32 1, %s14
    $region7: #{tpu_custom_call.1} parent=1 // loop_footer_branch
      %13 = sbr.rel target = $region3
    $region8: #{tpu_custom_call.1} parent=1 // loop_exit
      _
    %433 = vsyncpa [#allocation3], 1
    %s434 = scalar_lea.sflag [#allocation3], 1
    %435 = vsyncpa %s434, 1

</llo_original>
